<compile_context>
chip_gen: v6e
topology: v6e:2x2x1
jax: 0.10.0
libtpu: 0.0.40
codegen_flags: <defaults>
</compile_context>

<pallas_src>
import math

import jax
import jax.numpy as jnp
from jax.experimental import pallas as pl
from jax.experimental.pallas import tpu as pltpu

DEVICE_ENTRIES = 6
OUT_LANES = 128            # lane-dense output width (>= 2*num_actions)


def _round8(x):
    return (x + 7) // 8 * 8


# ----------------------------- Pallas kernel -------------------------------- #
def _make_actor_kernel(cfg):
    NOP = cfg["no_pad"]
    F0 = cfg["f0"]
    hf = cfg["hf"]
    hl = cfg["hl"]
    hidden_offs = cfg["hidden_offs"]
    r_mo = cfg["r_mo"]
    hd_dev = cfg["hd_dev"]
    hd_bias = cfg["hd_bias"]
    nh = len(hidden_offs)

    def kernel(obs_ref, w_ref, b_ref, h_ref, out_ref):
        f32 = jnp.float32
        x = obs_ref[...]                                               # [tb, NOP]

        # One fused, 8-row-aligned MXU pass over the unsplit (padded) observation:
        #   cols [0, hf)      = obs[:, 6:] @ (2*pi*W_four)   (Fourier phases, scale pre-folded)
        #   cols [hf, hf+hl)  = obs[:, :6] @ W_dev           (device embed, pre-bias)
        pre = jnp.dot(x, w_ref[0:NOP, :], preferred_element_type=f32)  # [tb, F0]
        proj = pre[:, :hf]
        dev_embed = pre[:, hf:hf + hl] + b_ref[nh + 1:nh + 2, 0:hl]

        # Fourier features (lane concat must stay: h is the residual carry).
        h = jnp.concatenate([jnp.sin(proj), jnp.cos(proj)], axis=-1)   # [tb, F0]

        # Residual ReLU blocks (hidden dims == F0); static 8-aligned slices of the packed stack.
        for k, r in enumerate(hidden_offs):
            y = jnp.dot(h, w_ref[r:r + F0, :], preferred_element_type=f32)
            h = h + jax.nn.relu(y + b_ref[k:k + 1, :])

        # Tanh output head of the residual MLP (cols [hl, F0) are provably zero).
        mlp = jnp.tanh(
            jnp.dot(h, w_ref[r_mo:r_mo + F0, :], preferred_element_type=f32)
            + b_ref[nh:nh + 1, :])

        # Fused means|log_stds head in split-accumulate form (no `mixed` lane concat),
        # against 128-lane zero-padded head weights -> fully lane-dense, unmasked store.
        out = (jnp.dot(mlp, h_ref[0:F0, :], preferred_element_type=f32)
               + jnp.dot(dev_embed, h_ref[hd_dev:hd_dev + hl, :], preferred_element_type=f32)
               + h_ref[hd_bias:hd_bias + 1, :])
        out_ref[...] = out                                             # [tb, OUT_LANES]

    return kernel


# ------------------------------- wrapper ------------------------------------ #
def actor_forward(observations, packs, cfg, *, block_b=None):
    """observations: [B, num_observations] f32 -> (ac_means, ac_log_stds)."""
    w_pack, b_pack, h_pack = packs
    B = observations.shape[0]
    NO = cfg["num_obs"]
    NOP = cfg["no_pad"]
    F0 = cfg["f0"]
    OW = cfg["ow"]
    R = cfg["n_w_rows"]
    NB = cfg["n_b_rows"]
    HR = cfg["n_h_rows"]
    A = cfg["a2"] // 2

    # Align the fused input matmul to the (8,128) sublane tile: pad obs to 24 columns
    # (weight rows [NO, NOP) are zero, so the math is unchanged).
    if NOP != NO:
        observations = jnp.pad(observations, ((0, 0), (0, NOP - NO)))

    # Batch tiling: single block by default (grid steps are a serial loop on v5e/v6e);
    # pass block_b = round8(B/2) on v7x at large batch to split over both TensorCores.
    if block_b is None or block_b >= B:
        tb = B
    else:
        tb = block_b
        assert B % tb == 0 and tb % 8 == 0, "batch block must divide B and be 8-aligned"

    out = pl.pallas_call(
        _make_actor_kernel(cfg),
        out_shape=jax.ShapeDtypeStruct((B, OW), jnp.float32),
        grid=(B // tb,),
        in_specs=[
            pl.BlockSpec((tb, NOP), lambda i: (i, 0)),   # observations (batch-tiled)
            pl.BlockSpec((R, F0), lambda i: (0, 0)),     # packed narrow weight stack (resident)
            pl.BlockSpec((NB, F0), lambda i: (0, 0)),    # packed narrow biases (resident)
            pl.BlockSpec((HR, OW), lambda i: (0, 0)),    # packed 128-lane head weights+bias
        ],
        out_specs=pl.BlockSpec((tb, OW), lambda i: (i, 0)),
        compiler_params=pltpu.CompilerParams(dimension_semantics=("parallel",)),
    )(observations, w_pack, b_pack, h_pack)

    return out[:, :A], out[:, A:2 * A]


# --------------------- one-time parameter packing --------------------------- #
def pack_params(params, num_observations, num_actions, features):
    """Pack the natural parameter dict into three resident stacks + a config dict."""
    NO = num_observations
    NOP = _round8(NO)
    F0 = features[0]
    Flast = features[-1]
    hf = F0 // 2
    hl = Flast // 2
    A2 = 2 * num_actions
    OW = OUT_LANES
    hidden = list(features[1:-1])
    nh = len(hidden)

    assert F0 % 8 == 0, "features[0] must be a multiple of 8"
    assert all(hdim == F0 for hdim in hidden), "residual blocks need matching dims"
    assert hf + hl <= F0 and hl <= F0, "packing assumes widths fit in F0 lanes"
    assert A2 <= OW, "action head must fit in the 128-lane output block"

    # --- narrow weight stack (F0 lanes), 8-aligned row offsets ---
    off = NOP                          # rows [0, NOP): fused input block
    hidden_offs = []
    for _ in hidden:
        hidden_offs.append(off)
        off += F0
    r_mo = off
    off += F0
    R = off

    w_pack = jnp.zeros((R, F0), jnp.float32)
    w_pack = w_pack.at[0:DEVICE_ENTRIES, hf:hf + hl].set(params["w_dev"])
    # fold the 2*pi Fourier scale into the weights (one-time transform)
    w_pack = w_pack.at[DEVICE_ENTRIES:NO, 0:hf].set((2.0 * math.pi) * params["w_four"])
    for k, r in enumerate(hidden_offs):
        w_pack = w_pack.at[r:r + F0, 0:F0].set(params[f"w_m{k}"])
    w_pack = w_pack.at[r_mo:r_mo + F0, 0:hl].set(params["w_mo"])

    # --- narrow bias stack (F0 lanes) ---
    NB = _round8(nh + 2)
    b_pack = jnp.zeros((NB, F0), jnp.float32)
    for k in range(nh):
        b_pack = b_pack.at[k, 0:F0].set(params[f"b_m{k}"][0])
    b_pack = b_pack.at[nh, 0:hl].set(params["b_mo"][0])
    b_pack = b_pack.at[nh + 1, 0:hl].set(params["b_dev"][0])

    # --- fused, 128-lane head stack: [mlp part | dev part | bias], zero-padded lanes ---
    hd_dev = F0
    hd_bias = F0 + _round8(hl)
    HR = hd_bias + 8
    w_head = jnp.concatenate([params["w_means"], params["w_lstd"]], axis=1)   # [2*hl, A2]
    b_head = jnp.concatenate([params["b_means"], params["b_lstd"]], axis=1)   # [1, A2]
    h_pack = jnp.zeros((HR, OW), jnp.float32)
    h_pack = h_pack.at[0:hl, 0:A2].set(w_head[:hl])                # mlp_out part
    h_pack = h_pack.at[hd_dev:hd_dev + hl, 0:A2].set(w_head[hl:])  # device-embed part
    h_pack = h_pack.at[hd_bias, 0:A2].set(b_head[0])               # fused bias row

    cfg = dict(num_obs=NO, no_pad=NOP, f0=F0, hf=hf, hl=hl, a2=A2, ow=OW,
               hidden_offs=tuple(hidden_offs), r_mo=r_mo,
               hd_dev=hd_dev, hd_bias=hd_bias,
               n_w_rows=R, n_b_rows=NB, n_h_rows=HR)
    return (w_pack, b_pack, h_pack), cfg


# --------------------------- deterministic params ---------------------------- #
def init_params(key, num_observations, num_actions, features):
    num_obs_rest = num_observations - DEVICE_ENTRIES
    half_last = features[-1] // 2
    half_first = features[0] // 2
    hidden = list(features[1:-1])

    def linear(k, fan_in, fan_out):
        kw, kb = jax.random.split(k)
        s = 1.0 / math.sqrt(fan_in)
        w = jax.random.uniform(kw, (fan_in, fan_out), jnp.float32, -s, s)
        b = jax.random.uniform(kb, (1, fan_out), jnp.float32, -s, s)
        return w, b

    keys = jax.random.split(key, 5 + len(hidden))
    params = {}
    params["w_dev"], params["b_dev"] = linear(keys[0], DEVICE_ENTRIES, half_last)
    params["w_four"] = jax.random.normal(keys[1], (num_obs_rest, half_first), jnp.float32)
    fan_in = features[0]
    for k, hdim in enumerate(hidden):
        params[f"w_m{k}"], params[f"b_m{k}"] = linear(keys[2 + k], fan_in, hdim)
        fan_in = hdim
    params["w_mo"], params["b_mo"] = linear(keys[2 + len(hidden)], fan_in, half_last)
    params["w_means"], params["b_means"] = linear(keys[3 + len(hidden)], features[-1], num_actions)
    params["w_lstd"], params["b_lstd"] = linear(keys[4 + len(hidden)], features[-1], num_actions)
    return params


# ------------------------------ pure-JAX ref --------------------------------- #
def actor_ref(obs, p, features):
    hidden = list(features[1:-1])
    dev = obs[:, :DEVICE_ENTRIES]
    rest = obs[:, DEVICE_ENTRIES:]
    dev_embed = dev @ p["w_dev"] + p["b_dev"]
    proj = 2.0 * math.pi * (rest @ p["w_four"])
    h = jnp.concatenate([jnp.sin(proj), jnp.cos(proj)], axis=-1)
    for k in range(len(hidden)):
        h = h + jax.nn.relu(h @ p[f"w_m{k}"] + p[f"b_m{k}"])
    mlp_out = jnp.tanh(h @ p["w_mo"] + p["b_mo"])
    mixed = jnp.concatenate([mlp_out, dev_embed], axis=-1)
    return mixed @ p["w_means"] + p["b_means"], mixed @ p["w_lstd"] + p["b_lstd"]


if __name__ == "__main__":
    # Small, module-consistent shapes.
    num_observations = 22          # 6 device entries + 16 "real" observation dims
    num_actions = 4
    features = (32, 32, 32, 32)    # features[0]=fourier width, features[-1]=head width

    key = jax.random.PRNGKey(0)
    k_obs, k_obs2, k_params = jax.random.split(key, 3)
    params = init_params(k_params, num_observations, num_actions, features)
    packs, cfg = pack_params(params, num_observations, num_actions, features)

    # Case 1: small batch — single block, no grid overhead (right choice on v5e/v6e).
    B = 8
    obs = jax.random.normal(k_obs, (B, num_observations), jnp.float32)
    means, log_stds = actor_forward(obs, packs, cfg)
    jax.block_until_ready((means, log_stds))
    ref_means, ref_lstd = actor_ref(obs, params, features)
    assert means.shape == (B, num_actions) and log_stds.shape == (B, num_actions)
    assert jnp.allclose(means, ref_means, atol=1e-4, rtol=1e-4)
    assert jnp.allclose(log_stds, ref_lstd, atol=1e-4, rtol=1e-4)

    # Case 2: larger batch — exactly two "parallel" grid steps (uses both v7x TensorCores;
    # on v5e/v6e the extra step costs only ~0.35 us).
    B2 = 1024
    obs2 = jax.random.normal(k_obs2, (B2, num_observations), jnp.float32)
    means2, log_stds2 = actor_forward(obs2, packs, cfg, block_b=B2 // 2)
    jax.block_until_ready((means2, log_stds2))
    ref_means2, ref_lstd2 = actor_ref(obs2, params, features)
    assert jnp.allclose(means2, ref_means2, atol=1e-4, rtol=1e-4)
    assert jnp.allclose(log_stds2, ref_lstd2, atol=1e-4, rtol=1e-4)

    print("KERNEL_OK")
</pallas_src>

<mosaic_0001>
module attributes {stable_mosaic.version = 11 : i64} {
  func.func @kernel(%arg0: i32, %arg1: memref<8x24xf32, #tpu.memory_space<vmem>>, %arg2: memref<120x32xf32, #tpu.memory_space<vmem>>, %arg3: memref<8x32xf32, #tpu.memory_space<vmem>>, %arg4: memref<56x128xf32, #tpu.memory_space<vmem>>, %arg5: memref<8x128xf32, #tpu.memory_space<vmem>>) attributes {dimension_semantics = [#tpu.dimension_semantics<parallel>], iteration_bounds = array<i64: 1>, scalar_prefetch = 0 : i64, scratch_operands = 0 : i64, tpu.core_type = #tpu.core_type<tc>, window_params = [{transform_indices = @transform_0, window_bounds = array<i64: 8, 24>}, {pipeline_mode = #tpu.pipeline_mode<synchronous>, transform_indices = @transform_1, window_bounds = array<i64: 120, 32>}, {pipeline_mode = #tpu.pipeline_mode<synchronous>, transform_indices = @transform_2, window_bounds = array<i64: 8, 32>}, {pipeline_mode = #tpu.pipeline_mode<synchronous>, transform_indices = @transform_3, window_bounds = array<i64: 56, 128>}, {transform_indices = @transform_4, window_bounds = array<i64: 8, 128>}]} {
    %c0 = arith.constant 0 : index
    %c0_0 = arith.constant 0 : index
    %0 = vector.load %arg1[%c0, %c0_0] : memref<8x24xf32, #tpu.memory_space<vmem>>, vector<8x24xf32>
    %c0_1 = arith.constant 0 : index
    %c0_2 = arith.constant 0 : index
    %1 = vector.load %arg2[%c0_1, %c0_2] : memref<120x32xf32, #tpu.memory_space<vmem>>, vector<24x32xf32>
    %cst = arith.constant dense<0.000000e+00> : vector<8x32xf32>
    %2 = tpu.matmul %0, %1, %cst {dimension_numbers = #tpu.dot_dimension_numbers<[1], [0], [0], [1], [0, 0, 1, 1], [], []>} : vector<8x24xf32>, vector<24x32xf32>, vector<8x32xf32> -> vector<8x32xf32>
    %3 = vector.extract_strided_slice %2 {offsets = [0, 0], sizes = [8, 16], strides = [1, 1]} : vector<8x32xf32> to vector<8x16xf32>
    %4 = vector.extract_strided_slice %2 {offsets = [0, 16], sizes = [8, 16], strides = [1, 1]} : vector<8x32xf32> to vector<8x16xf32>
    %c3 = arith.constant 3 : index
    %c0_3 = arith.constant 0 : index
    %5 = vector.load %arg3[%c3, %c0_3] : memref<8x32xf32, #tpu.memory_space<vmem>>, vector<1x16xf32>
    %6 = vector.broadcast %5 : vector<1x16xf32> to vector<8x16xf32>
    %7 = arith.addf %4, %6 : vector<8x16xf32>
    %8 = math.sin %3 : vector<8x16xf32>
    %9 = math.cos %3 : vector<8x16xf32>
    %10 = tpu.concatenate %8, %9 in 1 : vector<8x16xf32>, vector<8x16xf32> -> vector<8x32xf32>
    %c24 = arith.constant 24 : index
    %c0_4 = arith.constant 0 : index
    %11 = vector.load %arg2[%c24, %c0_4] : memref<120x32xf32, #tpu.memory_space<vmem>>, vector<32x32xf32>
    %cst_5 = arith.constant dense<0.000000e+00> : vector<8x32xf32>
    %12 = tpu.matmul %10, %11, %cst_5 {dimension_numbers = #tpu.dot_dimension_numbers<[1], [0], [0], [1], [0, 0, 1, 1], [], []>} : vector<8x32xf32>, vector<32x32xf32>, vector<8x32xf32> -> vector<8x32xf32>
    %c0_6 = arith.constant 0 : index
    %c0_7 = arith.constant 0 : index
    %13 = vector.load %arg3[%c0_6, %c0_7] : memref<8x32xf32, #tpu.memory_space<vmem>>, vector<1x32xf32>
    %14 = vector.broadcast %13 : vector<1x32xf32> to vector<8x32xf32>
    %15 = arith.addf %12, %14 : vector<8x32xf32>
    %cst_8 = arith.constant 0.000000e+00 : f32
    %16 = vector.broadcast %cst_8 : f32 to vector<8x32xf32>
    %17 = arith.maximumf %15, %16 : vector<8x32xf32>
    %18 = arith.addf %10, %17 : vector<8x32xf32>
    %c56 = arith.constant 56 : index
    %c0_9 = arith.constant 0 : index
    %19 = vector.load %arg2[%c56, %c0_9] : memref<120x32xf32, #tpu.memory_space<vmem>>, vector<32x32xf32>
    %cst_10 = arith.constant dense<0.000000e+00> : vector<8x32xf32>
    %20 = tpu.matmul %18, %19, %cst_10 {dimension_numbers = #tpu.dot_dimension_numbers<[1], [0], [0], [1], [0, 0, 1, 1], [], []>} : vector<8x32xf32>, vector<32x32xf32>, vector<8x32xf32> -> vector<8x32xf32>
    %c1 = arith.constant 1 : index
    %c0_11 = arith.constant 0 : index
    %21 = vector.load %arg3[%c1, %c0_11] : memref<8x32xf32, #tpu.memory_space<vmem>>, vector<1x32xf32>
    %22 = vector.broadcast %21 : vector<1x32xf32> to vector<8x32xf32>
    %23 = arith.addf %20, %22 : vector<8x32xf32>
    %cst_12 = arith.constant 0.000000e+00 : f32
    %24 = vector.broadcast %cst_12 : f32 to vector<8x32xf32>
    %25 = arith.maximumf %23, %24 : vector<8x32xf32>
    %26 = arith.addf %18, %25 : vector<8x32xf32>
    %c88 = arith.constant 88 : index
    %c0_13 = arith.constant 0 : index
    %27 = vector.load %arg2[%c88, %c0_13] : memref<120x32xf32, #tpu.memory_space<vmem>>, vector<32x32xf32>
    %cst_14 = arith.constant dense<0.000000e+00> : vector<8x32xf32>
    %28 = tpu.matmul %26, %27, %cst_14 {dimension_numbers = #tpu.dot_dimension_numbers<[1], [0], [0], [1], [0, 0, 1, 1], [], []>} : vector<8x32xf32>, vector<32x32xf32>, vector<8x32xf32> -> vector<8x32xf32>
    %c2 = arith.constant 2 : index
    %c0_15 = arith.constant 0 : index
    %29 = vector.load %arg3[%c2, %c0_15] : memref<8x32xf32, #tpu.memory_space<vmem>>, vector<1x32xf32>
    %30 = vector.broadcast %29 : vector<1x32xf32> to vector<8x32xf32>
    %31 = arith.addf %28, %30 : vector<8x32xf32>
    %32 = math.tanh %31 : vector<8x32xf32>
    %c0_16 = arith.constant 0 : index
    %c0_17 = arith.constant 0 : index
    %33 = vector.load %arg4[%c0_16, %c0_17] : memref<56x128xf32, #tpu.memory_space<vmem>>, vector<32x128xf32>
    %cst_18 = arith.constant dense<0.000000e+00> : vector<8x128xf32>
    %34 = tpu.matmul %32, %33, %cst_18 {dimension_numbers = #tpu.dot_dimension_numbers<[1], [0], [0], [1], [0, 0, 1, 1], [], []>} : vector<8x32xf32>, vector<32x128xf32>, vector<8x128xf32> -> vector<8x128xf32>
    %c32 = arith.constant 32 : index
    %c0_19 = arith.constant 0 : index
    %35 = vector.load %arg4[%c32, %c0_19] : memref<56x128xf32, #tpu.memory_space<vmem>>, vector<16x128xf32>
    %cst_20 = arith.constant dense<0.000000e+00> : vector<8x128xf32>
    %36 = tpu.matmul %7, %35, %cst_20 {dimension_numbers = #tpu.dot_dimension_numbers<[1], [0], [0], [1], [0, 0, 1, 1], [], []>} : vector<8x16xf32>, vector<16x128xf32>, vector<8x128xf32> -> vector<8x128xf32>
    %37 = arith.addf %34, %36 : vector<8x128xf32>
    %c48 = arith.constant 48 : index
    %c0_21 = arith.constant 0 : index
    %38 = vector.load %arg4[%c48, %c0_21] : memref<56x128xf32, #tpu.memory_space<vmem>>, vector<1x128xf32>
    %39 = vector.broadcast %38 : vector<1x128xf32> to vector<8x128xf32>
    %40 = arith.addf %37, %39 : vector<8x128xf32>
    %c0_22 = arith.constant 0 : index
    %c0_23 = arith.constant 0 : index
    %41 = vector.load %arg5[%c0_22, %c0_23] : memref<8x128xf32, #tpu.memory_space<vmem>>, vector<8x128xf32>
    tpu.vector_store %arg5[%c0_22, %c0_23], %40 {strides = array<i32>} : memref<8x128xf32, #tpu.memory_space<vmem>>, vector<8x128xf32>,
    return
  }
  func.func @transform_0(%arg0: i32) -> (i32, i32) {
    %c0_i32 = arith.constant 0 : i32
    %c0_i32_0 = arith.constant 0 : i32
    return %arg0, %c0_i32 : i32, i32
  }
  func.func @transform_1(%arg0: i32) -> (i32, i32) {
    %c0_i32 = arith.constant 0 : i32
    %c0_i32_0 = arith.constant 0 : i32
    %c0_i32_1 = arith.constant 0 : i32
    return %c0_i32, %c0_i32_0 : i32, i32
  }
  func.func @transform_2(%arg0: i32) -> (i32, i32) {
    %c0_i32 = arith.constant 0 : i32
    %c0_i32_0 = arith.constant 0 : i32
    %c0_i32_1 = arith.constant 0 : i32
    return %c0_i32, %c0_i32_0 : i32, i32
  }
  func.func @transform_3(%arg0: i32) -> (i32, i32) {
    %c0_i32 = arith.constant 0 : i32
    %c0_i32_0 = arith.constant 0 : i32
    %c0_i32_1 = arith.constant 0 : i32
    return %c0_i32, %c0_i32_0 : i32, i32
  }
  func.func @transform_4(%arg0: i32) -> (i32, i32) {
    %c0_i32 = arith.constant 0 : i32
    %c0_i32_0 = arith.constant 0 : i32
    return %arg0, %c0_i32 : i32, i32
  }
}

</mosaic_0001>

<llo_original>
// kernel: tpu_custom_call.1
$region0: #{tpu_custom_call.1}
  #allocation0 [shape = 'u32[]', space=smem, size = 0x4, offset = 0x4, fixed_abs, tag = 'smem constant byte address 0x4 - core index']
  #allocation1 [shape = 'u32[144,128]{1,0:T(1,128)}', space=vmem, size = 0x12000, scoped, tag = 'internal scratch']
  %s0 = inlined_call_operand.vmem [shape: f32[8,24], index: 0, kind: input, shape index: {}]
  %s1 = inlined_call_operand.vmem [shape: f32[120,32], index: 1, kind: input, shape index: {}]
  %s2 = inlined_call_operand.vmem [shape: f32[8,32], index: 2, kind: input, shape index: {}]
  %s3 = inlined_call_operand.vmem [shape: f32[56,128], index: 3, kind: input, shape index: {}]
  %s4 = inlined_call_operand.hbm [shape: f32[8,128], index: 4, kind: output, shape index: {}]
  %s5 = sld [smem:[#allocation0]]
  $region26: #{tpu_custom_call.1} parent=0
    _
  %s7 = ssub.s32 1, %s5
  %s8 = scalar_select 0, %s7, %s5
  $region1: #{tpu_custom_call.1} parent=0
    #allocation2 [shape = 'u8[4096]{0}', space=vmem, size = 0x1000, scoped, tag = 'output window, operand 0, single buffered']
    #allocation3 [shape = 's32[1]{0}', space=sflag, size = 0x4, scoped, tag = 'scoped memory for tpu_custom_call.1']
    %9 = vsyncpa [#allocation3], 0
    // Predicated region
    $region2: #{tpu_custom_call.1} parent=1 // pred_check
      _
    $region3: #{tpu_custom_call.1} parent=1 // pred_check_branch
      %11 = sbr.rel (0) target = $region5
    $region4: #{tpu_custom_call.1} parent=1 // pred_region
      _
    $region5: #{tpu_custom_call.1} parent=1 // pred_fallthru
      _
    // Predicated region
    $region6: #{tpu_custom_call.1} parent=1 // pred_check
      _
    $region7: #{tpu_custom_call.1} parent=1 // pred_check_branch
      %13 = sbr.rel (0) target = $region9
    $region8: #{tpu_custom_call.1} parent=1 // pred_region
      _
    $region9: #{tpu_custom_call.1} parent=1 // pred_fallthru
      _
    // Predicated region
    $region10: #{tpu_custom_call.1} parent=1 // pred_check
      _
    $region11: #{tpu_custom_call.1} parent=1 // pred_check_branch
      %15 = sbr.rel (0) target = $region13
    $region12: #{tpu_custom_call.1} parent=1 // pred_region
      _
    $region13: #{tpu_custom_call.1} parent=1 // pred_fallthru
      _
    // Predicated region
    $region14: #{tpu_custom_call.1} parent=1 // pred_check
      _
    $region15: #{tpu_custom_call.1} parent=1 // pred_check_branch
      %17 = sbr.rel (0) target = $region17
    $region16: #{tpu_custom_call.1} parent=1 // pred_region
      _
    $region17: #{tpu_custom_call.1} parent=1 // pred_fallthru
      _
    %v18 = vld [vmem:[%s0] sm:$0xff]
    %v19 = vld [vmem:[%s1] sm:$0xff]
    %v20 = vld [vmem:[%s1 + $0x8] sm:$0xff]
    %v21 = vld [vmem:[%s1 + $0x10] sm:$0xff]
    %vm22 = vcmask 195584
    %v24 = vsel %vm22, %v18, 0
    %26 = vmatprep.subr.mxu0 0.0
    %27 = vmatpush1.msra.mxu0 0.0
    %28 = vmatprep.subr.mxu0 0.0
    %29 = vmatpush1.msra.mxu0 0.0
    %30 = vmatprep.subr.mxu0 0.0
    %31 = vmatpush1.msra.mxu0 0.0
    %32 = vmatprep.subr.mxu0 0.0
    %33 = vmatpush1.msra.mxu0 0.0
    %34 = vmatprep.subr.mxu0 0.0
    %35 = vmatpush1.msra.mxu0 0.0
    %36 = vmatprep.subr.mxu0 0.0
    %37 = vmatpush1.msra.mxu0 0.0
    %38 = vmatprep.subr.mxu0 0.0
    %39 = vmatpush1.msra.mxu0 0.0
    %40 = vmatprep.subr.mxu0 0.0
    %41 = vmatpush1.msra.mxu0 0.0
    %42 = vmatprep.subr.mxu0 0.0
    %43 = vmatpush1.msra.mxu0 0.0
    %44 = vmatprep.subr.mxu0 0.0
    %45 = vmatpush1.msra.mxu0 0.0
    %46 = vmatprep.subr.mxu0 0.0
    %47 = vmatpush1.msra.mxu0 0.0
    %48 = vmatprep.subr.mxu0 0.0
    %49 = vmatpush1.msra.mxu0 0.0
    %50 = vmatprep.subr.mxu0 0.0
    %51 = vmatpush1.msra.mxu0 0.0
    %52 = vmatprep.subr.mxu0 0.0
    %53 = vmatpush1.msra.mxu0 %v21
    %54 = vmatprep.subr.mxu0 0.0
    %55 = vmatpush1.msra.mxu0 %v20
    %56 = vmatprep.subr.mxu0 0.0
    %57 = vmatpush1.msra.mxu0 %v19
    %58 = vmatprep.subr.mxu0 0.0
    %59 = vmatpush2.msra.mxu0 0.0
    %60 = vmatprep.subr.mxu0 0.0
    %61 = vmatpush2.msra.mxu0 0.0
    %62 = vmatprep.subr.mxu0 0.0
    %63 = vmatpush2.msra.mxu0 0.0
    %64 = vmatprep.subr.mxu0 0.0
    %65 = vmatpush2.msra.mxu0 0.0
    %66 = vmatprep.subr.mxu0 0.0
    %67 = vmatpush2.msra.mxu0 0.0
    %68 = vmatprep.subr.mxu0 0.0
    %69 = vmatpush2.msra.mxu0 0.0
    %70 = vmatprep.subr.mxu0 0.0
    %71 = vmatpush2.msra.mxu0 0.0
    %72 = vmatprep.subr.mxu0 0.0
    %73 = vmatpush2.msra.mxu0 0.0
    %74 = vmatprep.subr.mxu0 0.0
    %75 = vmatpush2.msra.mxu0 0.0
    %76 = vmatprep.subr.mxu0 0.0
    %77 = vmatpush2.msra.mxu0 0.0
    %78 = vmatprep.subr.mxu0 0.0
    %79 = vmatpush2.msra.mxu0 0.0
    %80 = vmatprep.subr.mxu0 0.0
    %81 = vmatpush2.msra.mxu0 0.0
    %82 = vmatprep.subr.mxu0 0.0
    %83 = vmatpush2.msra.mxu0 0.0
    %84 = vmatprep.subr.mxu0 0.0
    %85 = vmatpush2.msra.mxu0 0.0
    %86 = vmatprep.subr.mxu0 0.0
    %87 = vmatpush2.msra.mxu0 0.0
    %88 = vmatprep.subr.mxu0 0.0
    %89 = vmatpush2.msra.mxu0 0.0
    %90 = vmatprep.mubr.f32.mxu0 0.0
    %91 = vmatmul.mubr.f32.gmra.mxu0 %v24
    %v92 = vpop.f32.mrf.mxu0
    %v93 = vadd.f32 0.0, %v92
    %v94 = vpop.f32.mrf.mxu0
    %95 = vdwg.mxu0
    %v96 = vld [vmem:[%s2 + $0x3] sm:$0x1]
    %v97 = vlaneseq
    %v98 = vshrl.u32 %v97, 7
    %v99 = vsub.s32 0, %v98
    %v100 = vrot.slane %v96, %v99
    %102 = vrot.lane.b32.xlu0 %v100, 16
    %v103 = vpop.permute.xlu0 %102
    %v105 = vadd.f32 %v93, %v103
    %v106 = vand.u32 2147483647, %v93
    %vm107 = vcmp.le.f32.partialorder %v106, 0.7853982
    %vm108 = vcmp.lt.s32.totalorder %v93, 0
    %v109 = vand.u32 %v93, 2139095040
    %v110 = vshrl.u32 %v109, 23
    %v111 = vsub.s32 %v110, 127
    %v112 = vand.u32 2147483647, %v93
    %v113 = vand.u32 %v112, 8388607
    %v114 = vor.u32 %v113, 8388608
    %v115 = vsub.s32 0, %v114
    %v116 = vadd.s32 %v111, 1
    %vm117 = vcmp.gt.s32.totalorder %v116, 0
    %v118 = vsel %vm117, %v116, 0
    %v119 = vshrl.u32 %v118, 5
    %v120 = vand.u32 %v118, 31
    %v121 = vsub.s32 32, %v120
    %v122 = vshrl.u32 683565275, %v121
    %v123 = vshll.u32 683565275, %v120
    %v124 = vshrl.u32 2475754826, %v121
    %v125 = vor.u32 %v123, %v124
    %v126 = vshll.u32 2475754826, %v120
    %v127 = vshrl.u32 2131351028, %v121
    %v128 = vor.u32 %v126, %v127
    %v129 = vshll.u32 2131351028, %v120
    %v130 = vshrl.u32 2102212464, %v121
    %v131 = vor.u32 %v129, %v130
    %v132 = vshll.u32 2102212464, %v120
    %v133 = vshrl.u32 920167782, %v121
    %v134 = vor.u32 %v132, %v133
    %v135 = vshll.u32 920167782, %v120
    %v136 = vshrl.u32 1326507024, %v121
    %v137 = vor.u32 %v135, %v136
    %vm138 = vcmp.lt.s32.totalorder %v119, 1
    %vm139 = vcmp.lt.s32.totalorder %v119, 2
    %vm140 = vcmp.lt.s32.totalorder %v119, 3
    %vm141 = vcmp.lt.s32.totalorder %v119, 4
    %v142 = vsel %vm138, %v122, %v125
    %v143 = vsel %vm141, %v131, 2102212464
    %v144 = vsel %vm140, %v128, %v143
    %v145 = vsel %vm139, %v142, %v144
    %v146 = vsel %vm138, %v125, %v128
    %v147 = vsel %vm141, %v134, 920167782
    %v148 = vsel %vm140, %v131, %v147
    %v149 = vsel %vm139, %v146, %v148
    %v150 = vsel %vm138, %v128, %v131
    %v151 = vsel %vm141, %v137, 1326507024
    %v152 = vsel %vm140, %v134, %v151
    %v153 = vsel %vm139, %v150, %v152
    %v154 = vshll.u32 %v114, 8
    %v155 = vmul.u32.u64.compose %v154, %v153
    %v156 = vextract.low.u32 %v155
    %v157 = vextract.high.u32 %v155
    %v158 = vmul.u32.u64.compose %v154, %v149
    %v159 = vextract.low.u32 %v158
    %v160 = vextract.high.u32 %v158
    %v161 = vmul.u32 %v154, %v145
    %v162 = vadd.s32 %v157, %v159
    %vm163 = vc.u32 %v157, %v159
    %v164 = vadd.s32 %v160, 1
    %v165 = vsel %vm163, %v164, %v160
    %v166 = vadd.s32 %v161, %v165
    %v167 = vadd.s32 %v166, 536870912
    %v168 = vshrl.u32 %v167, 30
    %v169 = vshll.u32 %v168, 30
    %v170 = vsub.s32 %v166, %v169
    %vm171 = vcmp.lt.s32.totalorder %v170, 0
    %v172 = vsub.s32 0, %v170
    %v173 = vsel %vm171, %v172, %v170
    %v174 = vclz %v173
    %v175 = vsub.s32 %v174, 2
    %vm176 = vcmp.gt.s32.totalorder 0, %v175
    %v177 = vsel %vm176, 0, %v175
    %v178 = vsub.s32 32, %v177
    %v179 = vshll.u32 %v170, %v177
    %v180 = vshrl.u32 %v162, %v178
    %v181 = vor.u32 %v179, %v180
    %v182 = vsub.s32 4294967266, %v177
    %v183 = vadd.s32 %v182, 127
    %v184 = vshll.u32 %v183, 23
    %v185 = vor.u32 4788187, %v184
    %v186 = vand.u32 2147483647, %v185
    %v188 = vcvt.s32.f32 %v181
    %v189 = vmul.f32 %v188, %v186
    %v190 = vxor.u32 %v189, 2147483648
    %v191 = vsel %vm108, %v190, %v189
    %v192 = vsub.s32 4, %v168
    %v193 = vsel %vm108, %v192, %v168
    %v194 = vsel %vm107, %v93, %v191
    %v195 = vsel %vm107, 0, %v193
    %v196 = vcosq.f32.pop %v194
    %v197 = vsinq.f32.pop %v194
    %vm198 = vweird.f32 %v93
    %v199 = vadd.s32 %v195, 3
    %v200 = vand.u32 %v199, 3
    %vm201 = vcmp.lt.s32.totalorder %v200, 2
    %vm202 = vcmp.eq.s32.totalorder %v200, 0
    %v203 = vxor.u32 %v197, 2147483648
    %v204 = vsel %vm202, %v196, %v203
    %vm205 = vcmp.eq.s32.totalorder %v200, 2
    %v206 = vxor.u32 %v196, 2147483648
    %v207 = vsel %vm205, %v206, %v197
    %v208 = vsel %vm201, %v204, %v207
    %v209 = vsel %vm198, nan, %v208
    %v210 = vand.u32 2147483647, %v93
    %vm211 = vcmp.le.f32.partialorder %v210, 0.7853982
    %vm212 = vcmp.lt.s32.totalorder %v93, 0
    %v213 = vand.u32 %v93, 2139095040
    %v214 = vshrl.u32 %v213, 23
    %v215 = vsub.s32 %v214, 127
    %v216 = vand.u32 2147483647, %v93
    %v217 = vand.u32 %v216, 8388607
    %v218 = vor.u32 %v217, 8388608
    %v219 = vsub.s32 0, %v218
    %v220 = vadd.s32 %v215, 1
    %vm221 = vcmp.gt.s32.totalorder %v220, 0
    %v222 = vsel %vm221, %v220, 0
    %v223 = vshrl.u32 %v222, 5
    %v224 = vand.u32 %v222, 31
    %v225 = vsub.s32 32, %v224
    %v226 = vshrl.u32 683565275, %v225
    %v227 = vshll.u32 683565275, %v224
    %v228 = vshrl.u32 2475754826, %v225
    %v229 = vor.u32 %v227, %v228
    %v230 = vshll.u32 2475754826, %v224
    %v231 = vshrl.u32 2131351028, %v225
    %v232 = vor.u32 %v230, %v231
    %v233 = vshll.u32 2131351028, %v224
    %v234 = vshrl.u32 2102212464, %v225
    %v235 = vor.u32 %v233, %v234
    %v236 = vshll.u32 2102212464, %v224
    %v237 = vshrl.u32 920167782, %v225
    %v238 = vor.u32 %v236, %v237
    %v239 = vshll.u32 920167782, %v224
    %v240 = vshrl.u32 1326507024, %v225
    %v241 = vor.u32 %v239, %v240
    %vm242 = vcmp.lt.s32.totalorder %v223, 1
    %vm243 = vcmp.lt.s32.totalorder %v223, 2
    %vm244 = vcmp.lt.s32.totalorder %v223, 3
    %vm245 = vcmp.lt.s32.totalorder %v223, 4
    %v246 = vsel %vm242, %v226, %v229
    %v247 = vsel %vm245, %v235, 2102212464
    %v248 = vsel %vm244, %v232, %v247
    %v249 = vsel %vm243, %v246, %v248
    %v250 = vsel %vm242, %v229, %v232
    %v251 = vsel %vm245, %v238, 920167782
    %v252 = vsel %vm244, %v235, %v251
    %v253 = vsel %vm243, %v250, %v252
    %v254 = vsel %vm242, %v232, %v235
    %v255 = vsel %vm245, %v241, 1326507024
    %v256 = vsel %vm244, %v238, %v255
    %v257 = vsel %vm243, %v254, %v256
    %v258 = vshll.u32 %v218, 8
    %v259 = vmul.u32.u64.compose %v258, %v257
    %v260 = vextract.low.u32 %v259
    %v261 = vextract.high.u32 %v259
    %v262 = vmul.u32.u64.compose %v258, %v253
    %v263 = vextract.low.u32 %v262
    %v264 = vextract.high.u32 %v262
    %v265 = vmul.u32 %v258, %v249
    %v266 = vadd.s32 %v261, %v263
    %vm267 = vc.u32 %v261, %v263
    %v268 = vadd.s32 %v264, 1
    %v269 = vsel %vm267, %v268, %v264
    %v270 = vadd.s32 %v265, %v269
    %v271 = vadd.s32 %v270, 536870912
    %v272 = vshrl.u32 %v271, 30
    %v273 = vshll.u32 %v272, 30
    %v274 = vsub.s32 %v270, %v273
    %vm275 = vcmp.lt.s32.totalorder %v274, 0
    %v276 = vsub.s32 0, %v274
    %v277 = vsel %vm275, %v276, %v274
    %v278 = vclz %v277
    %v279 = vsub.s32 %v278, 2
    %vm280 = vcmp.gt.s32.totalorder 0, %v279
    %v281 = vsel %vm280, 0, %v279
    %v282 = vsub.s32 32, %v281
    %v283 = vshll.u32 %v274, %v281
    %v284 = vshrl.u32 %v266, %v282
    %v285 = vor.u32 %v283, %v284
    %v286 = vsub.s32 4294967266, %v281
    %v287 = vadd.s32 %v286, 127
    %v288 = vshll.u32 %v287, 23
    %v289 = vor.u32 4788187, %v288
    %v290 = vand.u32 2147483647, %v289
    %v292 = vcvt.s32.f32 %v285
    %v293 = vmul.f32 %v292, %v290
    %v294 = vxor.u32 %v293, 2147483648
    %v295 = vsel %vm212, %v294, %v293
    %v296 = vsub.s32 4, %v272
    %v297 = vsel %vm212, %v296, %v272
    %v298 = vsel %vm211, %v93, %v295
    %v299 = vsel %vm211, 0, %v297
    %v300 = vcosq.f32.pop %v298
    %v301 = vsinq.f32.pop %v298
    %vm302 = vweird.f32 %v93
    %v303 = vand.u32 %v299, 3
    %vm304 = vcmp.lt.s32.totalorder %v303, 2
    %vm305 = vcmp.eq.s32.totalorder %v303, 0
    %v306 = vxor.u32 %v301, 2147483648
    %v307 = vsel %vm305, %v300, %v306
    %vm308 = vcmp.eq.s32.totalorder %v303, 2
    %v309 = vxor.u32 %v300, 2147483648
    %v310 = vsel %vm308, %v309, %v301
    %v311 = vsel %vm304, %v307, %v310
    %v312 = vsel %vm302, nan, %v311
    %314 = vrot.lane.b32.xlu0 %v312, 16
    %v315 = vpop.permute.xlu0 %314
    %vm317 = vcmask 130048
    %v318 = vsel %vm317, %v209, %v315
    %v319 = vld [vmem:[%s1 + $0x18] sm:$0xff]
    %v320 = vld [vmem:[%s1 + $0x20] sm:$0xff]
    %v321 = vld [vmem:[%s1 + $0x28] sm:$0xff]
    %v322 = vld [vmem:[%s1 + $0x30] sm:$0xff]
    %v323 = vld [vmem:[%s2] sm:$0x1]
    %v324 = vlaneseq
    %v325 = vshrl.u32 %v324, 7
    %v326 = vsub.s32 0, %v325
    %v327 = vrot.slane %v323, %v326
    %vm328 = vcmask 261120
    %v330 = vsel %vm328, %v318, 0
    %332 = vmatprep.subr.mxu0 0.0
    %333 = vmatpush1.msra.mxu0 0.0
    %334 = vmatprep.subr.mxu0 0.0
    %335 = vmatpush1.msra.mxu0 0.0
    %336 = vmatprep.subr.mxu0 0.0
    %337 = vmatpush1.msra.mxu0 0.0
    %338 = vmatprep.subr.mxu0 0.0
    %339 = vmatpush1.msra.mxu0 0.0
    %340 = vmatprep.subr.mxu0 0.0
    %341 = vmatpush1.msra.mxu0 0.0
    %342 = vmatprep.subr.mxu0 0.0
    %343 = vmatpush1.msra.mxu0 0.0
    %344 = vmatprep.subr.mxu0 0.0
    %345 = vmatpush1.msra.mxu0 0.0
    %346 = vmatprep.subr.mxu0 0.0
    %347 = vmatpush1.msra.mxu0 0.0
    %348 = vmatprep.subr.mxu0 0.0
    %349 = vmatpush1.msra.mxu0 0.0
    %350 = vmatprep.subr.mxu0 0.0
    %351 = vmatpush1.msra.mxu0 0.0
    %352 = vmatprep.subr.mxu0 0.0
    %353 = vmatpush1.msra.mxu0 0.0
    %354 = vmatprep.subr.mxu0 0.0
    %355 = vmatpush1.msra.mxu0 0.0
    %356 = vmatprep.subr.mxu0 0.0
    %357 = vmatpush1.msra.mxu0 %v322
    %358 = vmatprep.subr.mxu0 0.0
    %359 = vmatpush1.msra.mxu0 %v321
    %360 = vmatprep.subr.mxu0 0.0
    %361 = vmatpush1.msra.mxu0 %v320
    %362 = vmatprep.subr.mxu0 0.0
    %363 = vmatpush1.msra.mxu0 %v319
    %364 = vmatprep.subr.mxu0 0.0
    %365 = vmatpush2.msra.mxu0 0.0
    %366 = vmatprep.subr.mxu0 0.0
    %367 = vmatpush2.msra.mxu0 0.0
    %368 = vmatprep.subr.mxu0 0.0
    %369 = vmatpush2.msra.mxu0 0.0
    %370 = vmatprep.subr.mxu0 0.0
    %371 = vmatpush2.msra.mxu0 0.0
    %372 = vmatprep.subr.mxu0 0.0
    %373 = vmatpush2.msra.mxu0 0.0
    %374 = vmatprep.subr.mxu0 0.0
    %375 = vmatpush2.msra.mxu0 0.0
    %376 = vmatprep.subr.mxu0 0.0
    %377 = vmatpush2.msra.mxu0 0.0
    %378 = vmatprep.subr.mxu0 0.0
    %379 = vmatpush2.msra.mxu0 0.0
    %380 = vmatprep.subr.mxu0 0.0
    %381 = vmatpush2.msra.mxu0 0.0
    %382 = vmatprep.subr.mxu0 0.0
    %383 = vmatpush2.msra.mxu0 0.0
    %384 = vmatprep.subr.mxu0 0.0
    %385 = vmatpush2.msra.mxu0 0.0
    %386 = vmatprep.subr.mxu0 0.0
    %387 = vmatpush2.msra.mxu0 0.0
    %388 = vmatprep.subr.mxu0 0.0
    %389 = vmatpush2.msra.mxu0 0.0
    %390 = vmatprep.subr.mxu0 0.0
    %391 = vmatpush2.msra.mxu0 0.0
    %392 = vmatprep.subr.mxu0 0.0
    %393 = vmatpush2.msra.mxu0 0.0
    %394 = vmatprep.subr.mxu0 0.0
    %395 = vmatpush2.msra.mxu0 0.0
    %396 = vmatprep.mubr.f32.mxu0 0.0
    %397 = vmatmul.mubr.f32.gmra.mxu0 %v330
    %v398 = vpop.f32.mrf.mxu0
    %v399 = vadd.f32 %v327, %v398
    %v400 = vpop.f32.mrf.mxu0
    %401 = vdwg.mxu0
    %v402 = vmax.f32 %v399, 0.0
    %v403 = vadd.f32 %v318, %v402
    %v404 = vld [vmem:[%s1 + $0x38] sm:$0xff]
    %v405 = vld [vmem:[%s1 + $0x40] sm:$0xff]
    %v406 = vld [vmem:[%s1 + $0x48] sm:$0xff]
    %v407 = vld [vmem:[%s1 + $0x50] sm:$0xff]
    %v408 = vld [vmem:[%s2 + $0x1] sm:$0x1]
    %v409 = vlaneseq
    %v410 = vshrl.u32 %v409, 7
    %v411 = vsub.s32 0, %v410
    %v412 = vrot.slane %v408, %v411
    %v414 = vsel %vm328, %v403, 0
    %416 = vmatprep.subr.mxu0 0.0
    %417 = vmatpush1.msra.mxu0 0.0
    %418 = vmatprep.subr.mxu0 0.0
    %419 = vmatpush1.msra.mxu0 0.0
    %420 = vmatprep.subr.mxu0 0.0
    %421 = vmatpush1.msra.mxu0 0.0
    %422 = vmatprep.subr.mxu0 0.0
    %423 = vmatpush1.msra.mxu0 0.0
    %424 = vmatprep.subr.mxu0 0.0
    %425 = vmatpush1.msra.mxu0 0.0
    %426 = vmatprep.subr.mxu0 0.0
    %427 = vmatpush1.msra.mxu0 0.0
    %428 = vmatprep.subr.mxu0 0.0
    %429 = vmatpush1.msra.mxu0 0.0
    %430 = vmatprep.subr.mxu0 0.0
    %431 = vmatpush1.msra.mxu0 0.0
    %432 = vmatprep.subr.mxu0 0.0
    %433 = vmatpush1.msra.mxu0 0.0
    %434 = vmatprep.subr.mxu0 0.0
    %435 = vmatpush1.msra.mxu0 0.0
    %436 = vmatprep.subr.mxu0 0.0
    %437 = vmatpush1.msra.mxu0 0.0
    %438 = vmatprep.subr.mxu0 0.0
    %439 = vmatpush1.msra.mxu0 0.0
    %440 = vmatprep.subr.mxu0 0.0
    %441 = vmatpush1.msra.mxu0 %v407
    %442 = vmatprep.subr.mxu0 0.0
    %443 = vmatpush1.msra.mxu0 %v406
    %444 = vmatprep.subr.mxu0 0.0
    %445 = vmatpush1.msra.mxu0 %v405
    %446 = vmatprep.subr.mxu0 0.0
    %447 = vmatpush1.msra.mxu0 %v404
    %448 = vmatprep.subr.mxu0 0.0
    %449 = vmatpush2.msra.mxu0 0.0
    %450 = vmatprep.subr.mxu0 0.0
    %451 = vmatpush2.msra.mxu0 0.0
    %452 = vmatprep.subr.mxu0 0.0
    %453 = vmatpush2.msra.mxu0 0.0
    %454 = vmatprep.subr.mxu0 0.0
    %455 = vmatpush2.msra.mxu0 0.0
    %456 = vmatprep.subr.mxu0 0.0
    %457 = vmatpush2.msra.mxu0 0.0
    %458 = vmatprep.subr.mxu0 0.0
    %459 = vmatpush2.msra.mxu0 0.0
    %460 = vmatprep.subr.mxu0 0.0
    %461 = vmatpush2.msra.mxu0 0.0
    %462 = vmatprep.subr.mxu0 0.0
    %463 = vmatpush2.msra.mxu0 0.0
    %464 = vmatprep.subr.mxu0 0.0
    %465 = vmatpush2.msra.mxu0 0.0
    %466 = vmatprep.subr.mxu0 0.0
    %467 = vmatpush2.msra.mxu0 0.0
    %468 = vmatprep.subr.mxu0 0.0
    %469 = vmatpush2.msra.mxu0 0.0
    %470 = vmatprep.subr.mxu0 0.0
    %471 = vmatpush2.msra.mxu0 0.0
    %472 = vmatprep.subr.mxu0 0.0
    %473 = vmatpush2.msra.mxu0 0.0
    %474 = vmatprep.subr.mxu0 0.0
    %475 = vmatpush2.msra.mxu0 0.0
    %476 = vmatprep.subr.mxu0 0.0
    %477 = vmatpush2.msra.mxu0 0.0
    %478 = vmatprep.subr.mxu0 0.0
    %479 = vmatpush2.msra.mxu0 0.0
    %480 = vmatprep.mubr.f32.mxu0 0.0
    %481 = vmatmul.mubr.f32.gmra.mxu0 %v414
    %v482 = vpop.f32.mrf.mxu0
    %v483 = vadd.f32 %v412, %v482
    %v484 = vpop.f32.mrf.mxu0
    %485 = vdwg.mxu0
    %v486 = vmax.f32 %v483, 0.0
    %v487 = vadd.f32 %v403, %v486
    %v488 = vld [vmem:[%s1 + $0x58] sm:$0xff]
    %v489 = vld [vmem:[%s1 + $0x60] sm:$0xff]
    %v490 = vld [vmem:[%s1 + $0x68] sm:$0xff]
    %v491 = vld [vmem:[%s1 + $0x70] sm:$0xff]
    %v492 = vld [vmem:[%s2 + $0x2] sm:$0x1]
    %v493 = vlaneseq
    %v494 = vshrl.u32 %v493, 7
    %v495 = vsub.s32 0, %v494
    %v496 = vrot.slane %v492, %v495
    %v498 = vsel %vm328, %v487, 0
    %500 = vmatprep.subr.mxu0 0.0
    %501 = vmatpush1.msra.mxu0 0.0
    %502 = vmatprep.subr.mxu0 0.0
    %503 = vmatpush1.msra.mxu0 0.0
    %504 = vmatprep.subr.mxu0 0.0
    %505 = vmatpush1.msra.mxu0 0.0
    %506 = vmatprep.subr.mxu0 0.0
    %507 = vmatpush1.msra.mxu0 0.0
    %508 = vmatprep.subr.mxu0 0.0
    %509 = vmatpush1.msra.mxu0 0.0
    %510 = vmatprep.subr.mxu0 0.0
    %511 = vmatpush1.msra.mxu0 0.0
    %512 = vmatprep.subr.mxu0 0.0
    %513 = vmatpush1.msra.mxu0 0.0
    %514 = vmatprep.subr.mxu0 0.0
    %515 = vmatpush1.msra.mxu0 0.0
    %516 = vmatprep.subr.mxu0 0.0
    %517 = vmatpush1.msra.mxu0 0.0
    %518 = vmatprep.subr.mxu0 0.0
    %519 = vmatpush1.msra.mxu0 0.0
    %520 = vmatprep.subr.mxu0 0.0
    %521 = vmatpush1.msra.mxu0 0.0
    %522 = vmatprep.subr.mxu0 0.0
    %523 = vmatpush1.msra.mxu0 0.0
    %524 = vmatprep.subr.mxu0 0.0
    %525 = vmatpush1.msra.mxu0 %v491
    %526 = vmatprep.subr.mxu0 0.0
    %527 = vmatpush1.msra.mxu0 %v490
    %528 = vmatprep.subr.mxu0 0.0
    %529 = vmatpush1.msra.mxu0 %v489
    %530 = vmatprep.subr.mxu0 0.0
    %531 = vmatpush1.msra.mxu0 %v488
    %532 = vmatprep.subr.mxu0 0.0
    %533 = vmatpush2.msra.mxu0 0.0
    %534 = vmatprep.subr.mxu0 0.0
    %535 = vmatpush2.msra.mxu0 0.0
    %536 = vmatprep.subr.mxu0 0.0
    %537 = vmatpush2.msra.mxu0 0.0
    %538 = vmatprep.subr.mxu0 0.0
    %539 = vmatpush2.msra.mxu0 0.0
    %540 = vmatprep.subr.mxu0 0.0
    %541 = vmatpush2.msra.mxu0 0.0
    %542 = vmatprep.subr.mxu0 0.0
    %543 = vmatpush2.msra.mxu0 0.0
    %544 = vmatprep.subr.mxu0 0.0
    %545 = vmatpush2.msra.mxu0 0.0
    %546 = vmatprep.subr.mxu0 0.0
    %547 = vmatpush2.msra.mxu0 0.0
    %548 = vmatprep.subr.mxu0 0.0
    %549 = vmatpush2.msra.mxu0 0.0
    %550 = vmatprep.subr.mxu0 0.0
    %551 = vmatpush2.msra.mxu0 0.0
    %552 = vmatprep.subr.mxu0 0.0
    %553 = vmatpush2.msra.mxu0 0.0
    %554 = vmatprep.subr.mxu0 0.0
    %555 = vmatpush2.msra.mxu0 0.0
    %556 = vmatprep.subr.mxu0 0.0
    %557 = vmatpush2.msra.mxu0 0.0
    %558 = vmatprep.subr.mxu0 0.0
    %559 = vmatpush2.msra.mxu0 0.0
    %560 = vmatprep.subr.mxu0 0.0
    %561 = vmatpush2.msra.mxu0 0.0
    %562 = vmatprep.subr.mxu0 0.0
    %563 = vmatpush2.msra.mxu0 0.0
    %564 = vmatprep.mubr.f32.mxu0 0.0
    %565 = vmatmul.mubr.f32.gmra.mxu0 %v498
    %v566 = vpop.f32.mrf.mxu0
    %v567 = vadd.f32 %v496, %v566
    %v568 = vpop.f32.mrf.mxu0
    %569 = vdwg.mxu0
    %v570 = vtanh.pop %v567
    %v571 = vld [vmem:[%s3] sm:$0xff]
    %v572 = vld [vmem:[%s3 + $0x8] sm:$0xff]
    %v573 = vld [vmem:[%s3 + $0x10] sm:$0xff]
    %v574 = vld [vmem:[%s3 + $0x18] sm:$0xff]
    %v575 = vld [vmem:[%s3 + $0x20] sm:$0xff]
    %v576 = vld [vmem:[%s3 + $0x28] sm:$0xff]
    %578 = vrot.lane.b32.xlu0 %v105, 112
    %v579 = vpop.permute.xlu0 %578
    %v580 = vsel %vm317, %v579, 0
    %582 = vmatprep.subr.mxu0 0.0
    %583 = vmatpush1.msra.mxu0 0.0
    %584 = vmatprep.subr.mxu0 0.0
    %585 = vmatpush1.msra.mxu0 0.0
    %586 = vmatprep.subr.mxu0 0.0
    %587 = vmatpush1.msra.mxu0 0.0
    %588 = vmatprep.subr.mxu0 0.0
    %589 = vmatpush1.msra.mxu0 0.0
    %590 = vmatprep.subr.mxu0 0.0
    %591 = vmatpush1.msra.mxu0 0.0
    %592 = vmatprep.subr.mxu0 0.0
    %593 = vmatpush1.msra.mxu0 0.0
    %594 = vmatprep.subr.mxu0 0.0
    %595 = vmatpush1.msra.mxu0 0.0
    %596 = vmatprep.subr.mxu0 0.0
    %597 = vmatpush1.msra.mxu0 0.0
    %598 = vmatprep.subr.mxu0 0.0
    %599 = vmatpush1.msra.mxu0 0.0
    %600 = vmatprep.subr.mxu0 0.0
    %601 = vmatpush1.msra.mxu0 0.0
    %602 = vmatprep.subr.mxu0 0.0
    %603 = vmatpush1.msra.mxu0 0.0
    %604 = vmatprep.subr.mxu0 0.0
    %605 = vmatpush1.msra.mxu0 0.0
    %606 = vmatprep.subr.mxu0 0.0
    %607 = vmatpush1.msra.mxu0 0.0
    %608 = vmatprep.subr.mxu0 0.0
    %609 = vmatpush1.msra.mxu0 0.0
    %610 = vmatprep.subr.mxu0 0.0
    %611 = vmatpush1.msra.mxu0 %v576
    %612 = vmatprep.subr.mxu0 0.0
    %613 = vmatpush1.msra.mxu0 %v575
    %614 = vmatprep.subr.mxu0 0.0
    %615 = vmatpush2.msra.mxu0 0.0
    %616 = vmatprep.subr.mxu0 0.0
    %617 = vmatpush2.msra.mxu0 0.0
    %618 = vmatprep.subr.mxu0 0.0
    %619 = vmatpush2.msra.mxu0 0.0
    %620 = vmatprep.subr.mxu0 0.0
    %621 = vmatpush2.msra.mxu0 0.0
    %622 = vmatprep.subr.mxu0 0.0
    %623 = vmatpush2.msra.mxu0 0.0
    %624 = vmatprep.subr.mxu0 0.0
    %625 = vmatpush2.msra.mxu0 0.0
    %626 = vmatprep.subr.mxu0 0.0
    %627 = vmatpush2.msra.mxu0 0.0
    %628 = vmatprep.subr.mxu0 0.0
    %629 = vmatpush2.msra.mxu0 0.0
    %630 = vmatprep.subr.mxu0 0.0
    %631 = vmatpush2.msra.mxu0 0.0
    %632 = vmatprep.subr.mxu0 0.0
    %633 = vmatpush2.msra.mxu0 0.0
    %634 = vmatprep.subr.mxu0 0.0
    %635 = vmatpush2.msra.mxu0 0.0
    %636 = vmatprep.subr.mxu0 0.0
    %637 = vmatpush2.msra.mxu0 0.0
    %638 = vmatprep.subr.mxu0 0.0
    %639 = vmatpush2.msra.mxu0 0.0
    %640 = vmatprep.subr.mxu0 0.0
    %641 = vmatpush2.msra.mxu0 0.0
    %642 = vmatprep.subr.mxu0 0.0
    %643 = vmatpush2.msra.mxu0 0.0
    %644 = vmatprep.subr.mxu0 0.0
    %645 = vmatpush2.msra.mxu0 0.0
    %646 = vmatprep.mubr.f32.mxu0 0.0
    %647 = vmatmul.mubr.f32.gmra.mxu0 %v580
    %v648 = vpop.f32.mrf.mxu0
    %v649 = vadd.f32 0.0, %v648
    %v650 = vpop.f32.mrf.mxu0
    %651 = vdwg.mxu0
    %v653 = vsel %vm328, %v570, 0
    %655 = vmatprep.subr.mxu0 0.0
    %656 = vmatpush1.msra.mxu0 0.0
    %657 = vmatprep.subr.mxu0 0.0
    %658 = vmatpush1.msra.mxu0 0.0
    %659 = vmatprep.subr.mxu0 0.0
    %660 = vmatpush1.msra.mxu0 0.0
    %661 = vmatprep.subr.mxu0 0.0
    %662 = vmatpush1.msra.mxu0 0.0
    %663 = vmatprep.subr.mxu0 0.0
    %664 = vmatpush1.msra.mxu0 0.0
    %665 = vmatprep.subr.mxu0 0.0
    %666 = vmatpush1.msra.mxu0 0.0
    %667 = vmatprep.subr.mxu0 0.0
    %668 = vmatpush1.msra.mxu0 0.0
    %669 = vmatprep.subr.mxu0 0.0
    %670 = vmatpush1.msra.mxu0 0.0
    %671 = vmatprep.subr.mxu0 0.0
    %672 = vmatpush1.msra.mxu0 0.0
    %673 = vmatprep.subr.mxu0 0.0
    %674 = vmatpush1.msra.mxu0 0.0
    %675 = vmatprep.subr.mxu0 0.0
    %676 = vmatpush1.msra.mxu0 0.0
    %677 = vmatprep.subr.mxu0 0.0
    %678 = vmatpush1.msra.mxu0 0.0
    %679 = vmatprep.subr.mxu0 0.0
    %680 = vmatpush1.msra.mxu0 %v574
    %681 = vmatprep.subr.mxu0 0.0
    %682 = vmatpush1.msra.mxu0 %v573
    %683 = vmatprep.subr.mxu0 0.0
    %684 = vmatpush1.msra.mxu0 %v572
    %685 = vmatprep.subr.mxu0 0.0
    %686 = vmatpush1.msra.mxu0 %v571
    %687 = vmatprep.subr.mxu0 0.0
    %688 = vmatpush2.msra.mxu0 0.0
    %689 = vmatprep.subr.mxu0 0.0
    %690 = vmatpush2.msra.mxu0 0.0
    %691 = vmatprep.subr.mxu0 0.0
    %692 = vmatpush2.msra.mxu0 0.0
    %693 = vmatprep.subr.mxu0 0.0
    %694 = vmatpush2.msra.mxu0 0.0
    %695 = vmatprep.subr.mxu0 0.0
    %696 = vmatpush2.msra.mxu0 0.0
    %697 = vmatprep.subr.mxu0 0.0
    %698 = vmatpush2.msra.mxu0 0.0
    %699 = vmatprep.subr.mxu0 0.0
    %700 = vmatpush2.msra.mxu0 0.0
    %701 = vmatprep.subr.mxu0 0.0
    %702 = vmatpush2.msra.mxu0 0.0
    %703 = vmatprep.subr.mxu0 0.0
    %704 = vmatpush2.msra.mxu0 0.0
    %705 = vmatprep.subr.mxu0 0.0
    %706 = vmatpush2.msra.mxu0 0.0
    %707 = vmatprep.subr.mxu0 0.0
    %708 = vmatpush2.msra.mxu0 0.0
    %709 = vmatprep.subr.mxu0 0.0
    %710 = vmatpush2.msra.mxu0 0.0
    %711 = vmatprep.subr.mxu0 0.0
    %712 = vmatpush2.msra.mxu0 0.0
    %713 = vmatprep.subr.mxu0 0.0
    %714 = vmatpush2.msra.mxu0 0.0
    %715 = vmatprep.subr.mxu0 0.0
    %716 = vmatpush2.msra.mxu0 0.0
    %717 = vmatprep.subr.mxu0 0.0
    %718 = vmatpush2.msra.mxu0 0.0
    %719 = vmatprep.mubr.f32.mxu0 0.0
    %720 = vmatmul.mubr.f32.gmra.mxu0 %v653
    %v721 = vpop.f32.mrf.mxu0
    %v722 = vadd.f32 %v649, %v721
    %v723 = vpop.f32.mrf.mxu0
    %724 = vdwg.mxu0
    %v725 = vld [vmem:[%s3 + $0x30] sm:$0x1]
    %v726 = vlaneseq
    %v727 = vshrl.u32 %v726, 7
    %v728 = vsub.s32 0, %v727
    %v729 = vrot.slane %v725, %v728
    %v730 = vadd.f32 %v722, %v729
    %731 = vst [vmem:[#allocation2] sm:$0xff] %v730
    // Predicated region
    $region18: #{tpu_custom_call.1} parent=1 // pred_check
      _
    $region19: #{tpu_custom_call.1} parent=1 // pred_check_branch
      %733 = sbr.rel (0) target = $region21
    $region20: #{tpu_custom_call.1} parent=1 // pred_region
      %s735 = ssub.s32 128, 128
      %736 = vsyncadd [#allocation3], %s735
      %s738 = sshll.u32 [#allocation2], 4
      %s739 = int_to_ptr.vmem [resolvable:$true] %s738
      %741 = dma.vmem_to_hbm [thread:$0]  %s739, 128, %s4, [#allocation3]
    $region21: #{tpu_custom_call.1} parent=1 // pred_fallthru
      _
    // Predicated region
    $region22: #{tpu_custom_call.1} parent=1 // pred_check
      _
    $region23: #{tpu_custom_call.1} parent=1 // pred_check_branch
      %743 = sbr.rel (0) target = $region25
    $region24: #{tpu_custom_call.1} parent=1 // pred_region
      %744 = dma.done [#allocation3], 128
    $region25: #{tpu_custom_call.1} parent=1 // pred_fallthru
      _
    %745 = vsyncpa [#allocation3], 1

</llo_original>
